<compile_context>
chip_gen: v6e
topology: v6e:2x2x1
jax: 0.10.0
libtpu: 0.0.40
codegen_flags: <defaults>
</compile_context>

<pallas_src>
import jax
import jax.numpy as jnp
from jax import lax
from jax.experimental import pallas as pl
from jax.experimental.pallas import tpu as pltpu


def _net_aug_loss_kernel(x_ref, m_ref, w1_ref, b1_ref, w2_hbm_ref, b2_ref,
                         loss_ref, w2_vmem, w2_sem):
    # Kick off the second-layer weight DMA immediately; it overlaps with the
    # masked pooling and the first matmul, and is waited on only right before
    # the second matmul needs it.
    w2_copy = pltpu.make_async_copy(w2_hbm_ref, w2_vmem, w2_sem)
    w2_copy.start()

    # ---- masked mean pooling: einsum('bij,bi,b->bj', x, m, 1/m.sum(1)) ----
    # Both augmented views are stacked along batch by the wrapper, so this
    # (and the MLP below) runs once on a (2B, ...) operand.
    m = m_ref[...]                                        # (2B, S, 1)
    # NOTE: like the PyTorch reference, no guard against an all-zero mask row
    # (the reciprocal would be inf); the driver keeps token 0 always on.
    inv_cnt = 1.0 / jnp.sum(m, axis=1)                    # (2B, 1)
    pooled = jnp.sum(x_ref[...] * m, axis=1) * inv_cnt    # (2B, D) f32

    # ---- projection head: Linear -> ReLU -> Linear (bf16 MXU, f32 acc) ----
    h = jnp.dot(pooled.astype(jnp.bfloat16), w1_ref[...],
                preferred_element_type=jnp.float32) + b1_ref[...]
    h = jnp.maximum(h, 0.0)                               # f32 on the VPU
    w2_copy.wait()                                        # w2 now in VMEM
    z = jnp.dot(h.astype(jnp.bfloat16), w2_vmem[...],
                preferred_element_type=jnp.float32) + b2_ref[...]   # (2B, D)

    b = z.shape[0] // 2                                   # static python int
    z1 = z[:b]                                            # (B, D)
    z2 = z[b:]                                            # (B, D)

    # ---- cosine similarity, temperature-scaled exp ----
    # Normalize first (EUP rsqrt), then contract the last dims directly so no
    # explicit z2 transpose is materialized.  Tiny eps guards a zero row
    # (the PyTorch reference has no eps; this only changes exact-zero rows).
    z1n = z1 * lax.rsqrt(jnp.sum(z1 * z1, axis=1, keepdims=True) + 1e-12)
    z2n = z2 * lax.rsqrt(jnp.sum(z2 * z2, axis=1, keepdims=True) + 1e-12)
    inv_temp = 10.0                                       # 1 / 0.1, folded
    cos = lax.dot_general(z1n, z2n, (((1,), (1,)), ((), ())),
                          preferred_element_type=jnp.float32)        # (B, B)
    mat_sim = jnp.exp(cos * inv_temp)

    # ---- NT-Xent style loss, diagonal computed analytically ----
    # log(diag) = inv_temp * cos_ii exactly: no iota/where diag extraction and
    # no exp->log roundtrip on the positive pair.  Reductions stay 2-D.
    log_diag = inv_temp * jnp.sum(z1n * z2n, axis=1, keepdims=True)   # (B, 1)
    diag = jnp.exp(log_diag)                                          # (B, 1)
    row_sum = jnp.sum(mat_sim, axis=1, keepdims=True)                 # (B, 1)
    per_row = log_diag - jnp.log(row_sum - diag)                      # (B, 1)
    loss2d = jnp.sum(per_row, axis=0, keepdims=True) * (-1.0 / b)     # (1, 1)
    loss_ref[0, 0] = loss2d[0, 0]                         # scalar -> SMEM


@jax.jit
def net_aug_loss(output1, output2, mat_mask1, mat_mask2, params):
    w1, b1, w2, b2 = params
    B, S, D = output1.shape
    # Stack the two views along batch so the kernel does a single pooling +
    # MLP pass (no in-kernel concatenate); masks get S on the sublane axis so
    # the in-kernel broadcast against the D lane axis needs no relayout.
    x = jnp.concatenate([output1, output2], axis=0)                   # (2B,S,D)
    m = jnp.concatenate([mat_mask1, mat_mask2], axis=0).reshape(2 * B, S, 1)
    vmem = pl.BlockSpec(memory_space=pltpu.MemorySpace.VMEM)
    out = pl.pallas_call(
        _net_aug_loss_kernel,
        out_shape=jax.ShapeDtypeStruct((1, 1), jnp.float32),
        in_specs=[vmem, vmem, vmem, vmem,
                  pl.BlockSpec(memory_space=pl.ANY),   # w2 stays in HBM;
                  vmem],                               # DMA'd inside the kernel
        out_specs=pl.BlockSpec(memory_space=pltpu.MemorySpace.SMEM),
        scratch_shapes=[pltpu.VMEM((D, D), jnp.bfloat16),   # w2 landing buffer
                        pltpu.SemaphoreType.DMA(())],
    )(x, m, w1.astype(jnp.bfloat16), b1, w2.astype(jnp.bfloat16), b2)
    return out[0, 0]


def init_params(key, d=256):
    k1, k2, k3, k4 = jax.random.split(key, 4)
    # Matches nn.Linear(256, 256) shapes; stored as (in, out) so the kernel
    # computes x @ W + b.  Master copies stay f32; the wrapper ships bf16.
    scale = 1.0 / jnp.sqrt(d)
    w1 = jax.random.uniform(k1, (d, d), jnp.float32, -scale, scale)
    b1 = jax.random.uniform(k2, (1, d), jnp.float32, -scale, scale)
    w2 = jax.random.uniform(k3, (d, d), jnp.float32, -scale, scale)
    b2 = jax.random.uniform(k4, (1, d), jnp.float32, -scale, scale)
    return (w1, b1, w2, b2)


if __name__ == "__main__":
    key = jax.random.PRNGKey(0)
    kp, k1, k2, k3, k4 = jax.random.split(key, 5)

    B, S, D = 2, 8, 256   # D fixed at 256 by the projection head
    params = init_params(kp, D)

    output1 = jax.random.normal(k1, (B, S, D), jnp.float32)
    output2 = jax.random.normal(k2, (B, S, D), jnp.float32)
    # Binary masks; force first token on so mask sums are nonzero.
    mat_mask1 = jax.random.bernoulli(k3, 0.7, (B, S)).astype(jnp.float32)
    mat_mask2 = jax.random.bernoulli(k4, 0.7, (B, S)).astype(jnp.float32)
    mat_mask1 = mat_mask1.at[:, 0].set(1.0)
    mat_mask2 = mat_mask2.at[:, 0].set(1.0)

    loss = net_aug_loss(output1, output2, mat_mask1, mat_mask2, params)
    jax.block_until_ready(loss)
    print("KERNEL_OK")
</pallas_src>

<mosaic_0001>
module attributes {stable_mosaic.version = 11 : i64} {
  func.func @_net_aug_loss_kernel(%arg0: memref<4x8x256xf32, #tpu.memory_space<vmem>>, %arg1: memref<4x8x1xf32, #tpu.memory_space<vmem>>, %arg2: memref<256x256xbf16, #tpu.memory_space<vmem>>, %arg3: memref<1x256xf32, #tpu.memory_space<vmem>>, %arg4: memref<256x256xbf16, #tpu.memory_space<any>>, %arg5: memref<1x256xf32, #tpu.memory_space<vmem>>, %arg6: memref<1x1xf32, #tpu.memory_space<smem>>, %arg7: memref<256x256xbf16, #tpu.memory_space<vmem>>, %arg8: memref<!tpu.dma_semaphore, #tpu.memory_space<semaphore_mem>>) attributes {dimension_semantics = [], scalar_prefetch = 0 : i64, scratch_operands = 2 : i64, tpu.core_type = #tpu.core_type<tc>} {
    tpu.enqueue_dma source(%arg4 : memref<256x256xbf16, #tpu.memory_space<any>>) target(%arg7 : memref<256x256xbf16, #tpu.memory_space<vmem>>) target_semaphore(%arg8 : memref<!tpu.dma_semaphore, #tpu.memory_space<semaphore_mem>>)
    %c0 = arith.constant 0 : index
    %c0_0 = arith.constant 0 : index
    %c0_1 = arith.constant 0 : index
    %0 = vector.load %arg1[%c0, %c0_0, %c0_1] : memref<4x8x1xf32, #tpu.memory_space<vmem>>, vector<4x8x1xf32>
    %cst = arith.constant dense<0.000000e+00> : vector<4x1xf32>
    %1 = vector.multi_reduction <add>, %0, %cst [1] : vector<4x8x1xf32> to vector<4x1xf32>
    %cst_2 = arith.constant 1.000000e+00 : f32
    %2 = vector.broadcast %cst_2 : f32 to vector<4x1xf32>
    %3 = arith.divf %2, %1 : vector<4x1xf32>
    %c0_3 = arith.constant 0 : index
    %c0_4 = arith.constant 0 : index
    %c0_5 = arith.constant 0 : index
    %4 = vector.load %arg0[%c0_3, %c0_4, %c0_5] : memref<4x8x256xf32, #tpu.memory_space<vmem>>, vector<4x8x256xf32>
    %5 = vector.broadcast %0 : vector<4x8x1xf32> to vector<4x8x256xf32>
    %6 = arith.mulf %4, %5 : vector<4x8x256xf32>
    %cst_6 = arith.constant dense<0.000000e+00> : vector<4x256xf32>
    %7 = vector.multi_reduction <add>, %6, %cst_6 [1] : vector<4x8x256xf32> to vector<4x256xf32>
    %8 = vector.broadcast %3 : vector<4x1xf32> to vector<4x256xf32>
    %9 = arith.mulf %7, %8 : vector<4x256xf32>
    %10 = arith.truncf %9 : vector<4x256xf32> to vector<4x256xbf16>
    %c0_7 = arith.constant 0 : index
    %c0_8 = arith.constant 0 : index
    %11 = vector.load %arg2[%c0_7, %c0_8] : memref<256x256xbf16, #tpu.memory_space<vmem>>, vector<256x256xbf16>
    %cst_9 = arith.constant dense<0.000000e+00> : vector<4x256xf32>
    %12 = tpu.matmul %10, %11, %cst_9 {dimension_numbers = #tpu.dot_dimension_numbers<[1], [0], [0], [1], [0, 0, 1, 1], [], []>} : vector<4x256xbf16>, vector<256x256xbf16>, vector<4x256xf32> -> vector<4x256xf32>
    %c0_10 = arith.constant 0 : index
    %c0_11 = arith.constant 0 : index
    %13 = vector.load %arg3[%c0_10, %c0_11] : memref<1x256xf32, #tpu.memory_space<vmem>>, vector<1x256xf32>
    %14 = vector.broadcast %13 : vector<1x256xf32> to vector<4x256xf32>
    %15 = arith.addf %12, %14 : vector<4x256xf32>
    %cst_12 = arith.constant 0.000000e+00 : f32
    %16 = vector.broadcast %cst_12 : f32 to vector<4x256xf32>
    %17 = arith.maximumf %15, %16 : vector<4x256xf32>
    tpu.wait_dma2 semaphore(%arg8 : memref<!tpu.dma_semaphore, #tpu.memory_space<semaphore_mem>>) src(%arg4 : memref<256x256xbf16, #tpu.memory_space<any>>) dst(%arg7 : memref<256x256xbf16, #tpu.memory_space<vmem>>)
    %18 = arith.truncf %17 : vector<4x256xf32> to vector<4x256xbf16>
    %c0_13 = arith.constant 0 : index
    %c0_14 = arith.constant 0 : index
    %19 = vector.load %arg7[%c0_13, %c0_14] : memref<256x256xbf16, #tpu.memory_space<vmem>>, vector<256x256xbf16>
    %cst_15 = arith.constant dense<0.000000e+00> : vector<4x256xf32>
    %20 = tpu.matmul %18, %19, %cst_15 {dimension_numbers = #tpu.dot_dimension_numbers<[1], [0], [0], [1], [0, 0, 1, 1], [], []>} : vector<4x256xbf16>, vector<256x256xbf16>, vector<4x256xf32> -> vector<4x256xf32>
    %c0_16 = arith.constant 0 : index
    %c0_17 = arith.constant 0 : index
    %21 = vector.load %arg5[%c0_16, %c0_17] : memref<1x256xf32, #tpu.memory_space<vmem>>, vector<1x256xf32>
    %22 = vector.broadcast %21 : vector<1x256xf32> to vector<4x256xf32>
    %23 = arith.addf %20, %22 : vector<4x256xf32>
    %24 = vector.extract_strided_slice %23 {offsets = [0, 0], sizes = [2, 256], strides = [1, 1]} : vector<4x256xf32> to vector<2x256xf32>
    %25 = vector.extract_strided_slice %23 {offsets = [2, 0], sizes = [2, 256], strides = [1, 1]} : vector<4x256xf32> to vector<2x256xf32>
    %26 = arith.mulf %24, %24 : vector<2x256xf32>
    %cst_18 = arith.constant dense<0.000000e+00> : vector<2xf32>
    %27 = vector.multi_reduction <add>, %26, %cst_18 [1] : vector<2x256xf32> to vector<2xf32>
    %28 = vector.shape_cast %27 : vector<2xf32> to vector<2x1xf32>
    %cst_19 = arith.constant 9.99999996E-13 : f32
    %29 = vector.broadcast %cst_19 : f32 to vector<2x1xf32>
    %30 = arith.addf %28, %29 : vector<2x1xf32>
    %31 = math.rsqrt %30 : vector<2x1xf32>
    %32 = vector.broadcast %31 : vector<2x1xf32> to vector<2x256xf32>
    %33 = arith.mulf %24, %32 : vector<2x256xf32>
    %34 = arith.mulf %25, %25 : vector<2x256xf32>
    %cst_20 = arith.constant dense<0.000000e+00> : vector<2xf32>
    %35 = vector.multi_reduction <add>, %34, %cst_20 [1] : vector<2x256xf32> to vector<2xf32>
    %36 = vector.shape_cast %35 : vector<2xf32> to vector<2x1xf32>
    %cst_21 = arith.constant 9.99999996E-13 : f32
    %37 = vector.broadcast %cst_21 : f32 to vector<2x1xf32>
    %38 = arith.addf %36, %37 : vector<2x1xf32>
    %39 = math.rsqrt %38 : vector<2x1xf32>
    %40 = vector.broadcast %39 : vector<2x1xf32> to vector<2x256xf32>
    %41 = arith.mulf %25, %40 : vector<2x256xf32>
    %cst_22 = arith.constant dense<0.000000e+00> : vector<2x2xf32>
    %42 = tpu.matmul %33, %41, %cst_22 {dimension_numbers = #tpu.dot_dimension_numbers<[1], [1], [0], [0], [0, 0, 1, 0], [], []>} : vector<2x256xf32>, vector<2x256xf32>, vector<2x2xf32> -> vector<2x2xf32>
    %cst_23 = arith.constant 1.000000e+01 : f32
    %43 = vector.broadcast %cst_23 : f32 to vector<2x2xf32>
    %44 = arith.mulf %42, %43 : vector<2x2xf32>
    %45 = math.exp %44 : vector<2x2xf32>
    %46 = arith.mulf %33, %41 : vector<2x256xf32>
    %cst_24 = arith.constant dense<0.000000e+00> : vector<2xf32>
    %47 = vector.multi_reduction <add>, %46, %cst_24 [1] : vector<2x256xf32> to vector<2xf32>
    %48 = vector.shape_cast %47 : vector<2xf32> to vector<2x1xf32>
    %cst_25 = arith.constant 1.000000e+01 : f32
    %49 = vector.broadcast %cst_25 : f32 to vector<2x1xf32>
    %50 = arith.mulf %49, %48 : vector<2x1xf32>
    %51 = math.exp %50 : vector<2x1xf32>
    %cst_26 = arith.constant dense<0.000000e+00> : vector<2xf32>
    %52 = vector.multi_reduction <add>, %45, %cst_26 [1] : vector<2x2xf32> to vector<2xf32>
    %53 = vector.shape_cast %52 : vector<2xf32> to vector<2x1xf32>
    %54 = arith.subf %53, %51 : vector<2x1xf32>
    %55 = math.log %54 : vector<2x1xf32>
    %56 = arith.subf %50, %55 : vector<2x1xf32>
    %cst_27 = arith.constant dense<0.000000e+00> : vector<1xf32>
    %57 = vector.multi_reduction <add>, %56, %cst_27 [0] : vector<2x1xf32> to vector<1xf32>
    %58 = vector.shape_cast %57 : vector<1xf32> to vector<1x1xf32>
    %cst_28 = arith.constant -5.000000e-01 : f32
    %59 = vector.broadcast %cst_28 : f32 to vector<1x1xf32>
    %60 = arith.mulf %58, %59 : vector<1x1xf32>
    %61 = vector.extract %60[0, 0] : f32 from vector<1x1xf32>
    %c0_29 = arith.constant 0 : index
    %c0_30 = arith.constant 0 : index
    %62 = memref.load %arg6[%c0_29, %c0_30] : memref<1x1xf32, #tpu.memory_space<smem>>
    memref.store %61, %arg6[%c0_29, %c0_30] : memref<1x1xf32, #tpu.memory_space<smem>>
    return
  }
}

</mosaic_0001>

<llo_original>
// kernel: net_aug_loss.1
$region0: #{net_aug_loss.1}
  #allocation0 [shape = 'u32[]', space=smem, size = 0x4, offset = 0x4, fixed_abs, tag = 'smem constant byte address 0x4 - core index']
  #allocation1 [shape = 'u32[144,128]{1,0:T(1,128)}', space=vmem, size = 0x12000, scoped, tag = 'internal scratch']
  #allocation2 [shape = 'bf16[256,256]{1,0:T(8,128)(2,1)}', space=vmem, size = 0x20000, scoped, tag = 'scratch operand']
  #allocation3 [shape = 's32[1]{0}', space=sflag, size = 0x4, scoped, tag = 'scratch operand']
  #allocation6 [shape = 's32[]', space=sflag, size = 0x4, offset = 0, fixed_abs, tag = 'sflag constant byte address 0x0 - dummy sync flag']
  %s0 = inlined_call_operand.vmem [shape: f32[4,8,256], index: 0, kind: input, shape index: {}]
  %s1 = inlined_call_operand.vmem [shape: f32[4,8,1], index: 1, kind: input, shape index: {}]
  %s2 = inlined_call_operand.vmem [shape: bf16[256,256], index: 2, kind: input, shape index: {}]
  %s3 = inlined_call_operand.vmem [shape: f32[1,256], index: 3, kind: input, shape index: {}]
  %s4 = inlined_call_operand.vmem [shape: bf16[256,256], index: 4, kind: input, shape index: {}]
  %s5 = inlined_call_operand.vmem [shape: f32[1,256], index: 5, kind: input, shape index: {}]
  %s6 = inlined_call_operand.hbm [shape: f32[1,1], index: 6, kind: output, shape index: {}]
  %s7 = sld [smem:[#allocation0]]
  $region64: #{net_aug_loss.1} parent=0
    _
  %s9 = ssub.s32 1, %s7
  %s10 = scalar_select 0, %s9, %s7
  $region1: #{net_aug_loss.1} parent=0
    #allocation4 [shape = 'u8[512]{0}', space=smem, size = 0x200, scoped, tag = 'output window, operand 0, single buffered']
    #allocation5 [shape = 's32[1]{0}', space=sflag, size = 0x4, scoped, tag = 'scoped memory for net_aug_loss.1']
    %11 = vsyncpa [#allocation5], 0
    // Predicated region
    $region2: #{net_aug_loss.1} parent=1 // pred_check
      _
    $region3: #{net_aug_loss.1} parent=1 // pred_check_branch
      %13 = sbr.rel (0) target = $region5
    $region4: #{net_aug_loss.1} parent=1 // pred_region
      _
    $region5: #{net_aug_loss.1} parent=1 // pred_fallthru
      _
    // Predicated region
    $region6: #{net_aug_loss.1} parent=1 // pred_check
      _
    $region7: #{net_aug_loss.1} parent=1 // pred_check_branch
      %15 = sbr.rel (0) target = $region9
    $region8: #{net_aug_loss.1} parent=1 // pred_region
      _
    $region9: #{net_aug_loss.1} parent=1 // pred_fallthru
      _
    // Predicated region
    $region10: #{net_aug_loss.1} parent=1 // pred_check
      _
    $region11: #{net_aug_loss.1} parent=1 // pred_check_branch
      %17 = sbr.rel (0) target = $region13
    $region12: #{net_aug_loss.1} parent=1 // pred_region
      _
    $region13: #{net_aug_loss.1} parent=1 // pred_fallthru
      _
    // Predicated region
    $region14: #{net_aug_loss.1} parent=1 // pred_check
      _
    $region15: #{net_aug_loss.1} parent=1 // pred_check_branch
      %19 = sbr.rel (0) target = $region17
    $region16: #{net_aug_loss.1} parent=1 // pred_region
      _
    $region17: #{net_aug_loss.1} parent=1 // pred_fallthru
      _
    // Predicated region
    $region18: #{net_aug_loss.1} parent=1 // pred_check
      _
    $region19: #{net_aug_loss.1} parent=1 // pred_check_branch
      %21 = sbr.rel (0) target = $region21
    $region20: #{net_aug_loss.1} parent=1 // pred_region
      _
    $region21: #{net_aug_loss.1} parent=1 // pred_fallthru
      _
    %p23 = scmp.lt.u32.totalorder 256, 8
    %p24 = pneg %p23
    // Predicated region
    $region22: #{net_aug_loss.1} parent=1 // pred_check
      _
    $region23: #{net_aug_loss.1} parent=1 // pred_check_branch
      %26 = sbr.rel (%p23) target = $region25
    $region24: #{net_aug_loss.1} parent=1 // pred_region
      %s42 = sand.u32 256, 7
      %p43 = scmp.eq.s32.totalorder %s42, 0
      // Predicated region
      $region37: #{net_aug_loss.1} parent=24 // pred_check
        %p44 = pneg %p43
      $region38: #{net_aug_loss.1} parent=24 // pred_check_branch
        %46 = sbr.rel (%p44) target = $region40
      $region39: #{net_aug_loss.1} parent=24 // pred_region
        loop: start=0, step=1, limit=1
        $region41: #{net_aug_loss.1} parent=39 // loop_pre_header
          _
        $region42: #{net_aug_loss.1} parent=39 // loop_header
          %s48 = sphi 0, %s52
          %p49 = scmp.ge.s32.totalorder %s48, 1
          %s53 = sphi %s4, %s4
          %s54 = sphi [#allocation2], [#allocation2]
        $region43: #{net_aug_loss.1} parent=39 // loop_header_branch
          %51 = sbr.rel (%p49) target = $region47
        $region44: #{net_aug_loss.1} parent=39 // loop_body
          %v55 = vld [vmem:[%s53] sm:$0xff]
          %56 = vst [vmem:[%s54] sm:$0xff] %v55
          %v57 = vld [vmem:[%s53 + $0x8] sm:$0xff]
          %58 = vst [vmem:[%s54 + $0x8] sm:$0xff] %v57
          %v59 = vld [vmem:[%s53 + $0x10] sm:$0xff]
          %60 = vst [vmem:[%s54 + $0x10] sm:$0xff] %v59
          %v61 = vld [vmem:[%s53 + $0x18] sm:$0xff]
          %62 = vst [vmem:[%s54 + $0x18] sm:$0xff] %v61
          %v63 = vld [vmem:[%s53 + $0x20] sm:$0xff]
          %64 = vst [vmem:[%s54 + $0x20] sm:$0xff] %v63
          %v65 = vld [vmem:[%s53 + $0x28] sm:$0xff]
          %66 = vst [vmem:[%s54 + $0x28] sm:$0xff] %v65
          %v67 = vld [vmem:[%s53 + $0x30] sm:$0xff]
          %68 = vst [vmem:[%s54 + $0x30] sm:$0xff] %v67
          %v69 = vld [vmem:[%s53 + $0x38] sm:$0xff]
          %70 = vst [vmem:[%s54 + $0x38] sm:$0xff] %v69
          %v71 = vld [vmem:[%s53 + $0x40] sm:$0xff]
          %72 = vst [vmem:[%s54 + $0x40] sm:$0xff] %v71
          %v73 = vld [vmem:[%s53 + $0x48] sm:$0xff]
          %74 = vst [vmem:[%s54 + $0x48] sm:$0xff] %v73
          %v75 = vld [vmem:[%s53 + $0x50] sm:$0xff]
          %76 = vst [vmem:[%s54 + $0x50] sm:$0xff] %v75
          %v77 = vld [vmem:[%s53 + $0x58] sm:$0xff]
          %78 = vst [vmem:[%s54 + $0x58] sm:$0xff] %v77
          %v79 = vld [vmem:[%s53 + $0x60] sm:$0xff]
          %80 = vst [vmem:[%s54 + $0x60] sm:$0xff] %v79
          %v81 = vld [vmem:[%s53 + $0x68] sm:$0xff]
          %82 = vst [vmem:[%s54 + $0x68] sm:$0xff] %v81
          %v83 = vld [vmem:[%s53 + $0x70] sm:$0xff]
          %84 = vst [vmem:[%s54 + $0x70] sm:$0xff] %v83
          %v85 = vld [vmem:[%s53 + $0x78] sm:$0xff]
          %86 = vst [vmem:[%s54 + $0x78] sm:$0xff] %v85
          %v87 = vld [vmem:[%s53 + $0x80] sm:$0xff]
          %88 = vst [vmem:[%s54 + $0x80] sm:$0xff] %v87
          %v89 = vld [vmem:[%s53 + $0x88] sm:$0xff]
          %90 = vst [vmem:[%s54 + $0x88] sm:$0xff] %v89
          %v91 = vld [vmem:[%s53 + $0x90] sm:$0xff]
          %92 = vst [vmem:[%s54 + $0x90] sm:$0xff] %v91
          %v93 = vld [vmem:[%s53 + $0x98] sm:$0xff]
          %94 = vst [vmem:[%s54 + $0x98] sm:$0xff] %v93
          %v95 = vld [vmem:[%s53 + $0xa0] sm:$0xff]
          %96 = vst [vmem:[%s54 + $0xa0] sm:$0xff] %v95
          %v97 = vld [vmem:[%s53 + $0xa8] sm:$0xff]
          %98 = vst [vmem:[%s54 + $0xa8] sm:$0xff] %v97
          %v99 = vld [vmem:[%s53 + $0xb0] sm:$0xff]
          %100 = vst [vmem:[%s54 + $0xb0] sm:$0xff] %v99
          %v101 = vld [vmem:[%s53 + $0xb8] sm:$0xff]
          %102 = vst [vmem:[%s54 + $0xb8] sm:$0xff] %v101
          %v103 = vld [vmem:[%s53 + $0xc0] sm:$0xff]
          %104 = vst [vmem:[%s54 + $0xc0] sm:$0xff] %v103
          %v105 = vld [vmem:[%s53 + $0xc8] sm:$0xff]
          %106 = vst [vmem:[%s54 + $0xc8] sm:$0xff] %v105
          %v107 = vld [vmem:[%s53 + $0xd0] sm:$0xff]
          %108 = vst [vmem:[%s54 + $0xd0] sm:$0xff] %v107
          %v109 = vld [vmem:[%s53 + $0xd8] sm:$0xff]
          %110 = vst [vmem:[%s54 + $0xd8] sm:$0xff] %v109
          %v111 = vld [vmem:[%s53 + $0xe0] sm:$0xff]
          %112 = vst [vmem:[%s54 + $0xe0] sm:$0xff] %v111
          %v113 = vld [vmem:[%s53 + $0xe8] sm:$0xff]
          %114 = vst [vmem:[%s54 + $0xe8] sm:$0xff] %v113
          %v115 = vld [vmem:[%s53 + $0xf0] sm:$0xff]
          %116 = vst [vmem:[%s54 + $0xf0] sm:$0xff] %v115
          %v117 = vld [vmem:[%s53 + $0xf8] sm:$0xff]
          %118 = vst [vmem:[%s54 + $0xf8] sm:$0xff] %v117
        $region45: #{net_aug_loss.1} parent=39 // loop_footer
          %s52 = sadd.s32 1, %s48
        $region46: #{net_aug_loss.1} parent=39 // loop_footer_branch
          %47 = sbr.rel target = $region42
        $region47: #{net_aug_loss.1} parent=39 // loop_exit
          _
      $region40: #{net_aug_loss.1} parent=24 // pred_fallthru
        _
      %p119 = pneg %p43
      // Predicated region
      $region48: #{net_aug_loss.1} parent=24 // pred_check
        _
      $region49: #{net_aug_loss.1} parent=24 // pred_check_branch
        %121 = sbr.rel (%p43) target = $region51
      $region50: #{net_aug_loss.1} parent=24 // pred_region
        %s122 = sand.u32 256, 7
      $region51: #{net_aug_loss.1} parent=24 // pred_fallthru
        _
    $region25: #{net_aug_loss.1} parent=1 // pred_fallthru
      _
    // Predicated region
    $region26: #{net_aug_loss.1} parent=1 // pred_check
      %p27 = pneg %p23
    $region27: #{net_aug_loss.1} parent=1 // pred_check_branch
      %29 = sbr.rel (%p27) target = $region29
    $region28: #{net_aug_loss.1} parent=1 // pred_region
      %s30 = sshll.u32 1, 256
      %s31 = ssub.s32 %s30, 1
      loop: start=0, step=1, limit=1
      $region30: #{net_aug_loss.1} parent=28 // loop_pre_header
        _
      $region31: #{net_aug_loss.1} parent=28 // loop_header
        %s33 = sphi 0, %s37
        %p34 = scmp.ge.s32.totalorder %s33, 1
        %s38 = sphi %s4, %s4
        %s39 = sphi [#allocation2], [#allocation2]
      $region32: #{net_aug_loss.1} parent=28 // loop_header_branch
        %36 = sbr.rel (%p34) target = $region36
      $region33: #{net_aug_loss.1} parent=28 // loop_body
        %v40 = vld [vmem:[%s38] sm:%s31]
        %41 = vst [vmem:[%s39] sm:%s31] %v40
      $region34: #{net_aug_loss.1} parent=28 // loop_footer
        %s37 = sadd.s32 1, %s33
      $region35: #{net_aug_loss.1} parent=28 // loop_footer_branch
        %32 = sbr.rel target = $region31
      $region36: #{net_aug_loss.1} parent=28 // loop_exit
        _
    $region29: #{net_aug_loss.1} parent=1 // pred_fallthru
      _
    // Predicated region
    $region52: #{net_aug_loss.1} parent=1 // pred_check
      _
    $region53: #{net_aug_loss.1} parent=1 // pred_check_branch
      %125 = sbr.rel (0) target = $region55
    $region54: #{net_aug_loss.1} parent=1 // pred_region
      %126 = vsyncadd [#allocation3], 4096
    $region55: #{net_aug_loss.1} parent=1 // pred_fallthru
      _
    %v127 = vld [vmem:[%s1] sm:$0xff]
    %v128 = vld [vmem:[%s1 + $0x8] sm:$0xff]
    %v129 = vld [vmem:[%s1 + $0x10] sm:$0xff]
    %v130 = vld [vmem:[%s1 + $0x18] sm:$0xff]
    %vm131 = vcmask 7168
    %v132 = vsel %vm131, %v127, 0.0
    %v133 = vrot.slane %v132, 4
    %v134 = vadd.f32 %v132, %v133
    %v135 = vrot.slane %v134, 2
    %v136 = vadd.f32 %v134, %v135
    %v137 = vrot.slane %v136, 1
    %v138 = vadd.f32 %v136, %v137
    %v139 = vsel %vm131, %v128, 0.0
    %v140 = vrot.slane %v139, 4
    %v141 = vadd.f32 %v139, %v140
    %v142 = vrot.slane %v141, 2
    %v143 = vadd.f32 %v141, %v142
    %v144 = vrot.slane %v143, 1
    %v145 = vadd.f32 %v143, %v144
    %v146 = vsel %vm131, %v129, 0.0
    %v147 = vrot.slane %v146, 4
    %v148 = vadd.f32 %v146, %v147
    %v149 = vrot.slane %v148, 2
    %v150 = vadd.f32 %v148, %v149
    %v151 = vrot.slane %v150, 1
    %v152 = vadd.f32 %v150, %v151
    %v153 = vsel %vm131, %v130, 0.0
    %v154 = vrot.slane %v153, 4
    %v155 = vadd.f32 %v153, %v154
    %v156 = vrot.slane %v155, 2
    %v157 = vadd.f32 %v155, %v156
    %v158 = vrot.slane %v157, 1
    %v159 = vadd.f32 %v157, %v158
    %v160 = vrcp.pop %v138
    %v161 = vmul.f32 1.0, %v160
    %v162 = vrcp.pop %v145
    %v163 = vmul.f32 1.0, %v162
    %v164 = vrcp.pop %v152
    %v165 = vmul.f32 1.0, %v164
    %v166 = vrcp.pop %v159
    %v167 = vmul.f32 1.0, %v166
    %v168 = vld [vmem:[%s0] sm:$0xff]
    %v169 = vld [vmem:[%s0 + $0x8] sm:$0xff]
    %v170 = vld [vmem:[%s0 + $0x10] sm:$0xff]
    %v171 = vld [vmem:[%s0 + $0x18] sm:$0xff]
    %v172 = vld [vmem:[%s0 + $0x20] sm:$0xff]
    %v173 = vld [vmem:[%s0 + $0x28] sm:$0xff]
    %v174 = vld [vmem:[%s0 + $0x30] sm:$0xff]
    %v175 = vld [vmem:[%s0 + $0x38] sm:$0xff]
    %177 = vset.pattern.permute.xlu0 0
    %178 = vperm.xlu0 %177, %v127
    %v179 = vpop.permute.xlu0 %178
    %182 = vset.pattern.permute.xlu0 0
    %183 = vperm.xlu0 %182, %v128
    %v184 = vpop.permute.xlu0 %183
    %187 = vset.pattern.permute.xlu0 0
    %188 = vperm.xlu0 %187, %v129
    %v189 = vpop.permute.xlu0 %188
    %192 = vset.pattern.permute.xlu0 0
    %193 = vperm.xlu0 %192, %v130
    %v194 = vpop.permute.xlu0 %193
    %v196 = vmul.f32 %v168, %v179
    %v197 = vmul.f32 %v169, %v179
    %v198 = vmul.f32 %v170, %v184
    %v199 = vmul.f32 %v171, %v184
    %v200 = vmul.f32 %v172, %v189
    %v201 = vmul.f32 %v173, %v189
    %v202 = vmul.f32 %v174, %v194
    %v203 = vmul.f32 %v175, %v194
    %v204 = vrot.slane %v196, 4
    %v205 = vadd.f32 %v196, %v204
    %v206 = vrot.slane %v205, 2
    %v207 = vadd.f32 %v205, %v206
    %v208 = vrot.slane %v207, 1
    %v209 = vadd.f32 %v207, %v208
    %v210 = vrot.slane %v197, 4
    %v211 = vadd.f32 %v197, %v210
    %v212 = vrot.slane %v211, 2
    %v213 = vadd.f32 %v211, %v212
    %v214 = vrot.slane %v213, 1
    %v215 = vadd.f32 %v213, %v214
    %v216 = vrot.slane %v198, 4
    %v217 = vadd.f32 %v198, %v216
    %v218 = vrot.slane %v217, 2
    %v219 = vadd.f32 %v217, %v218
    %v220 = vrot.slane %v219, 1
    %v221 = vadd.f32 %v219, %v220
    %v222 = vrot.slane %v199, 4
    %v223 = vadd.f32 %v199, %v222
    %v224 = vrot.slane %v223, 2
    %v225 = vadd.f32 %v223, %v224
    %v226 = vrot.slane %v225, 1
    %v227 = vadd.f32 %v225, %v226
    %v228 = vrot.slane %v200, 4
    %v229 = vadd.f32 %v200, %v228
    %v230 = vrot.slane %v229, 2
    %v231 = vadd.f32 %v229, %v230
    %v232 = vrot.slane %v231, 1
    %v233 = vadd.f32 %v231, %v232
    %v234 = vrot.slane %v201, 4
    %v235 = vadd.f32 %v201, %v234
    %v236 = vrot.slane %v235, 2
    %v237 = vadd.f32 %v235, %v236
    %v238 = vrot.slane %v237, 1
    %v239 = vadd.f32 %v237, %v238
    %v240 = vrot.slane %v202, 4
    %v241 = vadd.f32 %v202, %v240
    %v242 = vrot.slane %v241, 2
    %v243 = vadd.f32 %v241, %v242
    %v244 = vrot.slane %v243, 1
    %v245 = vadd.f32 %v243, %v244
    %v246 = vrot.slane %v203, 4
    %v247 = vadd.f32 %v203, %v246
    %v248 = vrot.slane %v247, 2
    %v249 = vadd.f32 %v247, %v248
    %v250 = vrot.slane %v249, 1
    %v251 = vadd.f32 %v249, %v250
    %253 = vset.pattern.permute.xlu0 0
    %254 = vperm.xlu0 %253, %v161
    %v255 = vpop.permute.xlu0 %254
    %258 = vset.pattern.permute.xlu0 0
    %259 = vperm.xlu0 %258, %v163
    %v260 = vpop.permute.xlu0 %259
    %263 = vset.pattern.permute.xlu0 0
    %264 = vperm.xlu0 %263, %v165
    %v265 = vpop.permute.xlu0 %264
    %268 = vset.pattern.permute.xlu0 0
    %269 = vperm.xlu0 %268, %v167
    %v270 = vpop.permute.xlu0 %269
    %v272 = vmul.f32 %v209, %v255
    %v273 = vmul.f32 %v215, %v255
    %v274 = vmul.f32 %v221, %v260
    %v275 = vmul.f32 %v227, %v260
    %v276 = vmul.f32 %v233, %v265
    %v277 = vmul.f32 %v239, %v265
    %v278 = vmul.f32 %v245, %v270
    %v279 = vmul.f32 %v251, %v270
    %v280 = vpack.c.bf16 %v272, %v272
    %v281 = vpack.c.bf16 %v273, %v273
    %v282 = vpack.c.bf16 %v274, %v274
    %v283 = vpack.c.bf16 %v275, %v275
    %v284 = vpack.c.bf16 %v276, %v276
    %v285 = vpack.c.bf16 %v277, %v277
    %v286 = vpack.c.bf16 %v278, %v278
    %v287 = vpack.c.bf16 %v279, %v279
    %v288 = vld [vmem:[%s2] sm:$0xff]
    %v289 = vld [vmem:[%s2 + $0x8] sm:$0xff]
    %v290 = vld [vmem:[%s2 + $0x10] sm:$0xff]
    %v291 = vld [vmem:[%s2 + $0x18] sm:$0xff]
    %v292 = vld [vmem:[%s2 + $0x20] sm:$0xff]
    %v293 = vld [vmem:[%s2 + $0x28] sm:$0xff]
    %v294 = vld [vmem:[%s2 + $0x30] sm:$0xff]
    %v295 = vld [vmem:[%s2 + $0x38] sm:$0xff]
    %v296 = vld [vmem:[%s2 + $0x40] sm:$0xff]
    %v297 = vld [vmem:[%s2 + $0x48] sm:$0xff]
    %v298 = vld [vmem:[%s2 + $0x50] sm:$0xff]
    %v299 = vld [vmem:[%s2 + $0x58] sm:$0xff]
    %v300 = vld [vmem:[%s2 + $0x60] sm:$0xff]
    %v301 = vld [vmem:[%s2 + $0x68] sm:$0xff]
    %v302 = vld [vmem:[%s2 + $0x70] sm:$0xff]
    %v303 = vld [vmem:[%s2 + $0x78] sm:$0xff]
    %v304 = vld [vmem:[%s2 + $0x80] sm:$0xff]
    %v305 = vld [vmem:[%s2 + $0x88] sm:$0xff]
    %v306 = vld [vmem:[%s2 + $0x90] sm:$0xff]
    %v307 = vld [vmem:[%s2 + $0x98] sm:$0xff]
    %v308 = vld [vmem:[%s2 + $0xa0] sm:$0xff]
    %v309 = vld [vmem:[%s2 + $0xa8] sm:$0xff]
    %v310 = vld [vmem:[%s2 + $0xb0] sm:$0xff]
    %v311 = vld [vmem:[%s2 + $0xb8] sm:$0xff]
    %v312 = vld [vmem:[%s2 + $0xc0] sm:$0xff]
    %v313 = vld [vmem:[%s2 + $0xc8] sm:$0xff]
    %v314 = vld [vmem:[%s2 + $0xd0] sm:$0xff]
    %v315 = vld [vmem:[%s2 + $0xd8] sm:$0xff]
    %v316 = vld [vmem:[%s2 + $0xe0] sm:$0xff]
    %v317 = vld [vmem:[%s2 + $0xe8] sm:$0xff]
    %v318 = vld [vmem:[%s2 + $0xf0] sm:$0xff]
    %v319 = vld [vmem:[%s2 + $0xf8] sm:$0xff]
    %v320 = vld [vmem:[%s3] sm:$0x3]
    %v322 = vlaneseq
    %v323 = vshrl.u32 %v322, 7
    %v324 = vsub.s32 0, %v323
    %v325 = vrot.slane %v320, %v324
    %v326 = vlaneseq
    %v327 = vshrl.u32 %v326, 7
    %v328 = vsub.s32 1, %v327
    %v329 = vrot.slane %v320, %v328
    %v340 = vunpack.c.l.b16 %v280
    %v341 = vunpack.c.l.b16 %v281
    %v342 = vunpack.c.l.b16 %v282
    %v343 = vunpack.c.l.b16 %v283
    %v344 = vunpack.c.l.b16 %v284
    %v345 = vunpack.c.l.b16 %v285
    %v346 = vunpack.c.l.b16 %v286
    %v347 = vunpack.c.l.b16 %v287
    %vm348 = vcmask 1041409
    %v349 = vsel %vm348, %v342, %v340
    %vm350 = vcmask 1042434
    %v351 = vsel %vm350, %v344, %v349
    %vm352 = vcmask 1043459
    %v353 = vsel %vm352, %v346, %v351
    %v354 = vsel %vm348, %v343, %v341
    %v355 = vsel %vm350, %v345, %v354
    %v356 = vsel %vm352, %v347, %v355
    %v357 = vpack.c.b16 %v353, %v353
    %v358 = vpack.c.b16 %v356, %v356
    %v393 = vunpack.c.l.b16 %v288
    %v394 = vunpack.c.h.b16 %v288
    %v395 = vunpack.c.l.b16 %v289
    %v396 = vunpack.c.h.b16 %v289
    %v397 = vunpack.c.l.b16 %v290
    %v398 = vunpack.c.h.b16 %v290
    %v399 = vunpack.c.l.b16 %v291
    %v400 = vunpack.c.h.b16 %v291
    %v401 = vunpack.c.l.b16 %v292
    %v402 = vunpack.c.h.b16 %v292
    %v403 = vunpack.c.l.b16 %v293
    %v404 = vunpack.c.h.b16 %v293
    %v405 = vunpack.c.l.b16 %v294
    %v406 = vunpack.c.h.b16 %v294
    %v407 = vunpack.c.l.b16 %v295
    %v408 = vunpack.c.h.b16 %v295
    %v409 = vunpack.c.l.b16 %v296
    %v410 = vunpack.c.h.b16 %v296
    %v411 = vunpack.c.l.b16 %v297
    %v412 = vunpack.c.h.b16 %v297
    %v413 = vunpack.c.l.b16 %v298
    %v414 = vunpack.c.h.b16 %v298
    %v415 = vunpack.c.l.b16 %v299
    %v416 = vunpack.c.h.b16 %v299
    %v417 = vunpack.c.l.b16 %v300
    %v418 = vunpack.c.h.b16 %v300
    %v419 = vunpack.c.l.b16 %v301
    %v420 = vunpack.c.h.b16 %v301
    %v421 = vunpack.c.l.b16 %v302
    %v422 = vunpack.c.h.b16 %v302
    %v423 = vunpack.c.l.b16 %v303
    %v424 = vunpack.c.h.b16 %v303
    %v425 = vunpack.c.l.b16 %v304
    %v426 = vunpack.c.h.b16 %v304
    %v427 = vunpack.c.l.b16 %v305
    %v428 = vunpack.c.h.b16 %v305
    %v429 = vunpack.c.l.b16 %v306
    %v430 = vunpack.c.h.b16 %v306
    %v431 = vunpack.c.l.b16 %v307
    %v432 = vunpack.c.h.b16 %v307
    %v433 = vunpack.c.l.b16 %v308
    %v434 = vunpack.c.h.b16 %v308
    %v435 = vunpack.c.l.b16 %v309
    %v436 = vunpack.c.h.b16 %v309
    %v437 = vunpack.c.l.b16 %v310
    %v438 = vunpack.c.h.b16 %v310
    %v439 = vunpack.c.l.b16 %v311
    %v440 = vunpack.c.h.b16 %v311
    %v441 = vunpack.c.l.b16 %v312
    %v442 = vunpack.c.h.b16 %v312
    %v443 = vunpack.c.l.b16 %v313
    %v444 = vunpack.c.h.b16 %v313
    %v445 = vunpack.c.l.b16 %v314
    %v446 = vunpack.c.h.b16 %v314
    %v447 = vunpack.c.l.b16 %v315
    %v448 = vunpack.c.h.b16 %v315
    %v449 = vunpack.c.l.b16 %v316
    %v450 = vunpack.c.h.b16 %v316
    %v451 = vunpack.c.l.b16 %v317
    %v452 = vunpack.c.h.b16 %v317
    %v453 = vunpack.c.l.b16 %v318
    %v454 = vunpack.c.h.b16 %v318
    %v455 = vunpack.c.l.b16 %v319
    %v456 = vunpack.c.h.b16 %v319
    %v457 = vpack.c.b16 %v395, %v393
    %v458 = vpack.c.b16 %v396, %v394
    %v459 = vpack.c.b16 %v399, %v397
    %v460 = vpack.c.b16 %v400, %v398
    %v461 = vpack.c.b16 %v403, %v401
    %v462 = vpack.c.b16 %v404, %v402
    %v463 = vpack.c.b16 %v407, %v405
    %v464 = vpack.c.b16 %v408, %v406
    %v465 = vpack.c.b16 %v411, %v409
    %v466 = vpack.c.b16 %v412, %v410
    %v467 = vpack.c.b16 %v415, %v413
    %v468 = vpack.c.b16 %v416, %v414
    %v469 = vpack.c.b16 %v419, %v417
    %v470 = vpack.c.b16 %v420, %v418
    %v471 = vpack.c.b16 %v423, %v421
    %v472 = vpack.c.b16 %v424, %v422
    %v473 = vpack.c.b16 %v427, %v425
    %v474 = vpack.c.b16 %v428, %v426
    %v475 = vpack.c.b16 %v431, %v429
    %v476 = vpack.c.b16 %v432, %v430
    %v477 = vpack.c.b16 %v435, %v433
    %v478 = vpack.c.b16 %v436, %v434
    %v479 = vpack.c.b16 %v439, %v437
    %v480 = vpack.c.b16 %v440, %v438
    %v481 = vpack.c.b16 %v443, %v441
    %v482 = vpack.c.b16 %v444, %v442
    %v483 = vpack.c.b16 %v447, %v445
    %v484 = vpack.c.b16 %v448, %v446
    %v485 = vpack.c.b16 %v451, %v449
    %v486 = vpack.c.b16 %v452, %v450
    %v487 = vpack.c.b16 %v455, %v453
    %v488 = vpack.c.b16 %v456, %v454
    %521 = vmatprep.subr.bf16.mxu0 %v472
    %522 = vmatpush1.bf16.msra.mxu0 %v471
    %523 = vmatprep.subr.bf16.mxu0 %v470
    %524 = vmatpush1.bf16.msra.mxu0 %v469
    %525 = vmatprep.subr.bf16.mxu0 %v468
    %526 = vmatpush1.bf16.msra.mxu0 %v467
    %527 = vmatprep.subr.bf16.mxu0 %v466
    %528 = vmatpush1.bf16.msra.mxu0 %v465
    %529 = vmatprep.subr.bf16.mxu0 %v464
    %530 = vmatpush1.bf16.msra.mxu0 %v463
    %531 = vmatprep.subr.bf16.mxu0 %v462
    %532 = vmatpush1.bf16.msra.mxu0 %v461
    %533 = vmatprep.subr.bf16.mxu0 %v460
    %534 = vmatpush1.bf16.msra.mxu0 %v459
    %535 = vmatprep.subr.bf16.mxu0 %v458
    %536 = vmatpush1.bf16.msra.mxu0 %v457
    %537 = vmatprep.subr.bf16.mxu0 %v488
    %538 = vmatpush2.bf16.msra.mxu0 %v487
    %539 = vmatprep.subr.bf16.mxu0 %v486
    %540 = vmatpush2.bf16.msra.mxu0 %v485
    %541 = vmatprep.subr.bf16.mxu0 %v484
    %542 = vmatpush2.bf16.msra.mxu0 %v483
    %543 = vmatprep.subr.bf16.mxu0 %v482
    %544 = vmatpush2.bf16.msra.mxu0 %v481
    %545 = vmatprep.subr.bf16.mxu0 %v480
    %546 = vmatpush2.bf16.msra.mxu0 %v479
    %547 = vmatprep.subr.bf16.mxu0 %v478
    %548 = vmatpush2.bf16.msra.mxu0 %v477
    %549 = vmatprep.subr.bf16.mxu0 %v476
    %550 = vmatpush2.bf16.msra.mxu0 %v475
    %551 = vmatprep.subr.bf16.mxu0 %v474
    %552 = vmatpush2.bf16.msra.mxu0 %v473
    %553 = vmatprep.mubr.bf16.mxu0 %v358
    %554 = vmatmul.mubr.bf16.gmra.mxu0 %v357
    %v555 = vpop.f32.mrf.mxu0
    %v556 = vadd.f32 %v325, %v555
    %v557 = vpop.f32.mrf.mxu0
    %v558 = vadd.f32 %v329, %v557
    %v559 = vpop.f32.mrf.mxu0
    %v560 = vpop.f32.mrf.mxu0
    %561 = vdwg.mxu0
    %v562 = vmax.f32 %v556, 0.0
    %v563 = vmax.f32 %v558, 0.0
    %s564 = smul.u32 4, 32
    %s565 = smul.u32 %s564, 2
    %s566 = sshll.u32 %s565, 4
    %567 = dma.done [#allocation3], %s566
    %v568 = vpack.c.bf16 %v562, %v562
    %v569 = vpack.c.bf16 %v563, %v563
    %v570 = vld [vmem:[#allocation2] sm:$0xff]
    %v571 = vld [vmem:[#allocation2 + $0x8] sm:$0xff]
    %v572 = vld [vmem:[#allocation2 + $0x10] sm:$0xff]
    %v573 = vld [vmem:[#allocation2 + $0x18] sm:$0xff]
    %v574 = vld [vmem:[#allocation2 + $0x20] sm:$0xff]
    %v575 = vld [vmem:[#allocation2 + $0x28] sm:$0xff]
    %v576 = vld [vmem:[#allocation2 + $0x30] sm:$0xff]
    %v577 = vld [vmem:[#allocation2 + $0x38] sm:$0xff]
    %v578 = vld [vmem:[#allocation2 + $0x40] sm:$0xff]
    %v579 = vld [vmem:[#allocation2 + $0x48] sm:$0xff]
    %v580 = vld [vmem:[#allocation2 + $0x50] sm:$0xff]
    %v581 = vld [vmem:[#allocation2 + $0x58] sm:$0xff]
    %v582 = vld [vmem:[#allocation2 + $0x60] sm:$0xff]
    %v583 = vld [vmem:[#allocation2 + $0x68] sm:$0xff]
    %v584 = vld [vmem:[#allocation2 + $0x70] sm:$0xff]
    %v585 = vld [vmem:[#allocation2 + $0x78] sm:$0xff]
    %v586 = vld [vmem:[#allocation2 + $0x80] sm:$0xff]
    %v587 = vld [vmem:[#allocation2 + $0x88] sm:$0xff]
    %v588 = vld [vmem:[#allocation2 + $0x90] sm:$0xff]
    %v589 = vld [vmem:[#allocation2 + $0x98] sm:$0xff]
    %v590 = vld [vmem:[#allocation2 + $0xa0] sm:$0xff]
    %v591 = vld [vmem:[#allocation2 + $0xa8] sm:$0xff]
    %v592 = vld [vmem:[#allocation2 + $0xb0] sm:$0xff]
    %v593 = vld [vmem:[#allocation2 + $0xb8] sm:$0xff]
    %v594 = vld [vmem:[#allocation2 + $0xc0] sm:$0xff]
    %v595 = vld [vmem:[#allocation2 + $0xc8] sm:$0xff]
    %v596 = vld [vmem:[#allocation2 + $0xd0] sm:$0xff]
    %v597 = vld [vmem:[#allocation2 + $0xd8] sm:$0xff]
    %v598 = vld [vmem:[#allocation2 + $0xe0] sm:$0xff]
    %v599 = vld [vmem:[#allocation2 + $0xe8] sm:$0xff]
    %v600 = vld [vmem:[#allocation2 + $0xf0] sm:$0xff]
    %v601 = vld [vmem:[#allocation2 + $0xf8] sm:$0xff]
    %v602 = vld [vmem:[%s5] sm:$0x3]
    %v604 = vlaneseq
    %v605 = vshrl.u32 %v604, 7
    %v606 = vsub.s32 0, %v605
    %v607 = vrot.slane %v602, %v606
    %v608 = vlaneseq
    %v609 = vshrl.u32 %v608, 7
    %v610 = vsub.s32 1, %v609
    %v611 = vrot.slane %v602, %v610
    %v646 = vunpack.c.l.b16 %v570
    %v647 = vunpack.c.h.b16 %v570
    %v648 = vunpack.c.l.b16 %v571
    %v649 = vunpack.c.h.b16 %v571
    %v650 = vunpack.c.l.b16 %v572
    %v651 = vunpack.c.h.b16 %v572
    %v652 = vunpack.c.l.b16 %v573
    %v653 = vunpack.c.h.b16 %v573
    %v654 = vunpack.c.l.b16 %v574
    %v655 = vunpack.c.h.b16 %v574
    %v656 = vunpack.c.l.b16 %v575
    %v657 = vunpack.c.h.b16 %v575
    %v658 = vunpack.c.l.b16 %v576
    %v659 = vunpack.c.h.b16 %v576
    %v660 = vunpack.c.l.b16 %v577
    %v661 = vunpack.c.h.b16 %v577
    %v662 = vunpack.c.l.b16 %v578
    %v663 = vunpack.c.h.b16 %v578
    %v664 = vunpack.c.l.b16 %v579
    %v665 = vunpack.c.h.b16 %v579
    %v666 = vunpack.c.l.b16 %v580
    %v667 = vunpack.c.h.b16 %v580
    %v668 = vunpack.c.l.b16 %v581
    %v669 = vunpack.c.h.b16 %v581
    %v670 = vunpack.c.l.b16 %v582
    %v671 = vunpack.c.h.b16 %v582
    %v672 = vunpack.c.l.b16 %v583
    %v673 = vunpack.c.h.b16 %v583
    %v674 = vunpack.c.l.b16 %v584
    %v675 = vunpack.c.h.b16 %v584
    %v676 = vunpack.c.l.b16 %v585
    %v677 = vunpack.c.h.b16 %v585
    %v678 = vunpack.c.l.b16 %v586
    %v679 = vunpack.c.h.b16 %v586
    %v680 = vunpack.c.l.b16 %v587
    %v681 = vunpack.c.h.b16 %v587
    %v682 = vunpack.c.l.b16 %v588
    %v683 = vunpack.c.h.b16 %v588
    %v684 = vunpack.c.l.b16 %v589
    %v685 = vunpack.c.h.b16 %v589
    %v686 = vunpack.c.l.b16 %v590
    %v687 = vunpack.c.h.b16 %v590
    %v688 = vunpack.c.l.b16 %v591
    %v689 = vunpack.c.h.b16 %v591
    %v690 = vunpack.c.l.b16 %v592
    %v691 = vunpack.c.h.b16 %v592
    %v692 = vunpack.c.l.b16 %v593
    %v693 = vunpack.c.h.b16 %v593
    %v694 = vunpack.c.l.b16 %v594
    %v695 = vunpack.c.h.b16 %v594
    %v696 = vunpack.c.l.b16 %v595
    %v697 = vunpack.c.h.b16 %v595
    %v698 = vunpack.c.l.b16 %v596
    %v699 = vunpack.c.h.b16 %v596
    %v700 = vunpack.c.l.b16 %v597
    %v701 = vunpack.c.h.b16 %v597
    %v702 = vunpack.c.l.b16 %v598
    %v703 = vunpack.c.h.b16 %v598
    %v704 = vunpack.c.l.b16 %v599
    %v705 = vunpack.c.h.b16 %v599
    %v706 = vunpack.c.l.b16 %v600
    %v707 = vunpack.c.h.b16 %v600
    %v708 = vunpack.c.l.b16 %v601
    %v709 = vunpack.c.h.b16 %v601
    %v710 = vpack.c.b16 %v648, %v646
    %v711 = vpack.c.b16 %v649, %v647
    %v712 = vpack.c.b16 %v652, %v650
    %v713 = vpack.c.b16 %v653, %v651
    %v714 = vpack.c.b16 %v656, %v654
    %v715 = vpack.c.b16 %v657, %v655
    %v716 = vpack.c.b16 %v660, %v658
    %v717 = vpack.c.b16 %v661, %v659
    %v718 = vpack.c.b16 %v664, %v662
    %v719 = vpack.c.b16 %v665, %v663
    %v720 = vpack.c.b16 %v668, %v666
    %v721 = vpack.c.b16 %v669, %v667
    %v722 = vpack.c.b16 %v672, %v670
    %v723 = vpack.c.b16 %v673, %v671
    %v724 = vpack.c.b16 %v676, %v674
    %v725 = vpack.c.b16 %v677, %v675
    %v726 = vpack.c.b16 %v680, %v678
    %v727 = vpack.c.b16 %v681, %v679
    %v728 = vpack.c.b16 %v684, %v682
    %v729 = vpack.c.b16 %v685, %v683
    %v730 = vpack.c.b16 %v688, %v686
    %v731 = vpack.c.b16 %v689, %v687
    %v732 = vpack.c.b16 %v692, %v690
    %v733 = vpack.c.b16 %v693, %v691
    %v734 = vpack.c.b16 %v696, %v694
    %v735 = vpack.c.b16 %v697, %v695
    %v736 = vpack.c.b16 %v700, %v698
    %v737 = vpack.c.b16 %v701, %v699
    %v738 = vpack.c.b16 %v704, %v702
    %v739 = vpack.c.b16 %v705, %v703
    %v740 = vpack.c.b16 %v708, %v706
    %v741 = vpack.c.b16 %v709, %v707
    %774 = vmatprep.subr.bf16.mxu0 %v725
    %775 = vmatpush1.bf16.msra.mxu0 %v724
    %776 = vmatprep.subr.bf16.mxu0 %v723
    %777 = vmatpush1.bf16.msra.mxu0 %v722
    %778 = vmatprep.subr.bf16.mxu0 %v721
    %779 = vmatpush1.bf16.msra.mxu0 %v720
    %780 = vmatprep.subr.bf16.mxu0 %v719
    %781 = vmatpush1.bf16.msra.mxu0 %v718
    %782 = vmatprep.subr.bf16.mxu0 %v717
    %783 = vmatpush1.bf16.msra.mxu0 %v716
    %784 = vmatprep.subr.bf16.mxu0 %v715
    %785 = vmatpush1.bf16.msra.mxu0 %v714
    %786 = vmatprep.subr.bf16.mxu0 %v713
    %787 = vmatpush1.bf16.msra.mxu0 %v712
    %788 = vmatprep.subr.bf16.mxu0 %v711
    %789 = vmatpush1.bf16.msra.mxu0 %v710
    %790 = vmatprep.subr.bf16.mxu0 %v741
    %791 = vmatpush2.bf16.msra.mxu0 %v740
    %792 = vmatprep.subr.bf16.mxu0 %v739
    %793 = vmatpush2.bf16.msra.mxu0 %v738
    %794 = vmatprep.subr.bf16.mxu0 %v737
    %795 = vmatpush2.bf16.msra.mxu0 %v736
    %796 = vmatprep.subr.bf16.mxu0 %v735
    %797 = vmatpush2.bf16.msra.mxu0 %v734
    %798 = vmatprep.subr.bf16.mxu0 %v733
    %799 = vmatpush2.bf16.msra.mxu0 %v732
    %800 = vmatprep.subr.bf16.mxu0 %v731
    %801 = vmatpush2.bf16.msra.mxu0 %v730
    %802 = vmatprep.subr.bf16.mxu0 %v729
    %803 = vmatpush2.bf16.msra.mxu0 %v728
    %804 = vmatprep.subr.bf16.mxu0 %v727
    %805 = vmatpush2.bf16.msra.mxu0 %v726
    %806 = vmatprep.mubr.bf16.mxu0 %v569
    %807 = vmatmul.mubr.bf16.gmra.mxu0 %v568
    %v808 = vpop.f32.mrf.mxu0
    %v809 = vadd.f32 %v607, %v808
    %v810 = vpop.f32.mrf.mxu0
    %v811 = vadd.f32 %v611, %v810
    %v812 = vpop.f32.mrf.mxu0
    %v813 = vpop.f32.mrf.mxu0
    %814 = vdwg.mxu0
    %v815 = vmul.f32 %v809, %v809
    %v816 = vmul.f32 %v811, %v811
    %vm817 = vcmask 1041408
    %v818 = vsel %vm817, %v815, 0.0
    %v819 = vsel %vm817, %v816, 0.0
    %v820 = vadd.f32 %v818, %v819
    %821 = vadd.xlane.f32.xlu0 %v820
    %v822 = vpop.xlane.xlu0 %821
    %v823 = vadd.f32 %v822, 1e-12
    %v824 = vrsqrt.pop %v823
    %v825 = vmul.f32 %v809, %v824
    %v826 = vmul.f32 %v811, %v824
    %vm827 = vcmask 1043458
    %v828 = vsel %vm827, %v815, 0.0
    %v829 = vsel %vm827, %v816, 0.0
    %v830 = vadd.f32 %v828, %v829
    %831 = vadd.xlane.f32.xlu0 %v830
    %v832 = vpop.xlane.xlu0 %831
    %v833 = vadd.f32 %v832, 1e-12
    %v834 = vrsqrt.pop %v833
    %v835 = vmul.f32 %v809, %v834
    %v836 = vmul.f32 %v811, %v834
    %v839 = vrot.slane %v835, 2
    %v840 = vrot.slane %v836, 2
    %843 = vmatprep.subr.mxu0 0.0
    %844 = vmatpush1.xpose.msra.mxu0 0.0
    %845 = vmatprep.subr.mxu0 0.0
    %846 = vmatpush1.xpose.msra.mxu0 0.0
    %847 = vmatprep.subr.mxu0 0.0
    %848 = vmatpush1.xpose.msra.mxu0 0.0
    %849 = vmatprep.subr.mxu0 0.0
    %850 = vmatpush1.xpose.msra.mxu0 0.0
    %851 = vmatprep.subr.mxu0 0.0
    %852 = vmatpush1.xpose.msra.mxu0 0.0
    %853 = vmatprep.subr.mxu0 0.0
    %854 = vmatpush1.xpose.msra.mxu0 0.0
    %855 = vmatprep.subr.mxu0 0.0
    %856 = vmatpush1.xpose.msra.mxu0 0.0
    %857 = vmatprep.subr.mxu0 0.0
    %858 = vmatpush1.xpose.msra.mxu0 0.0
    %859 = vmatprep.subr.mxu0 0.0
    %860 = vmatpush1.xpose.msra.mxu0 0.0
    %861 = vmatprep.subr.mxu0 0.0
    %862 = vmatpush1.xpose.msra.mxu0 0.0
    %863 = vmatprep.subr.mxu0 0.0
    %864 = vmatpush1.xpose.msra.mxu0 0.0
    %865 = vmatprep.subr.mxu0 0.0
    %866 = vmatpush1.xpose.msra.mxu0 0.0
    %867 = vmatprep.subr.mxu0 0.0
    %868 = vmatpush1.xpose.msra.mxu0 0.0
    %869 = vmatprep.subr.mxu0 0.0
    %870 = vmatpush1.xpose.msra.mxu0 0.0
    %871 = vmatprep.subr.mxu0 0.0
    %872 = vmatpush1.xpose.msra.mxu0 0.0
    %873 = vmatprep.subr.mxu0 %v840
    %874 = vmatpush1.xpose.msra.mxu0 %v839
    %875 = vmatprep.subr.mxu0 0.0
    %876 = vmatpush2.xpose.msra.mxu0 0.0
    %877 = vmatprep.subr.mxu0 0.0
    %878 = vmatpush2.xpose.msra.mxu0 0.0
    %879 = vmatprep.subr.mxu0 0.0
    %880 = vmatpush2.xpose.msra.mxu0 0.0
    %881 = vmatprep.subr.mxu0 0.0
    %882 = vmatpush2.xpose.msra.mxu0 0.0
    %883 = vmatprep.subr.mxu0 0.0
    %884 = vmatpush2.xpose.msra.mxu0 0.0
    %885 = vmatprep.subr.mxu0 0.0
    %886 = vmatpush2.xpose.msra.mxu0 0.0
    %887 = vmatprep.subr.mxu0 0.0
    %888 = vmatpush2.xpose.msra.mxu0 0.0
    %889 = vmatprep.subr.mxu0 0.0
    %890 = vmatpush2.xpose.msra.mxu0 0.0
    %891 = vmatprep.subr.mxu0 0.0
    %892 = vmatpush2.xpose.msra.mxu0 0.0
    %893 = vmatprep.subr.mxu0 0.0
    %894 = vmatpush2.xpose.msra.mxu0 0.0
    %895 = vmatprep.subr.mxu0 0.0
    %896 = vmatpush2.xpose.msra.mxu0 0.0
    %897 = vmatprep.subr.mxu0 0.0
    %898 = vmatpush2.xpose.msra.mxu0 0.0
    %899 = vmatprep.subr.mxu0 0.0
    %900 = vmatpush2.xpose.msra.mxu0 0.0
    %901 = vmatprep.subr.mxu0 0.0
    %902 = vmatpush2.xpose.msra.mxu0 0.0
    %903 = vmatprep.subr.mxu0 0.0
    %904 = vmatpush2.xpose.msra.mxu0 0.0
    %905 = vmatprep.subr.mxu0 0.0
    %906 = vmatpush2.xpose.msra.mxu0 0.0
    %907 = vmatprep.mubr.f32.mxu0 %v826
    %908 = vmatmul.mubr.f32.gmra.mxu0 %v825
    %v909 = vpop.f32.mrf.mxu0
    %v910 = vadd.f32 0.0, %v909
    %v911 = vpop.f32.mrf.mxu0
    %912 = vdwg.mxu0
    %v913 = vmul.f32 %v910, 10.0
    %v914 = vmul.f32 %v913, 1.442695
    %v915 = vpow.pop %v914
    %v916 = vmul.f32 %v825, %v839
    %v917 = vmul.f32 %v826, %v840
    %v918 = vsel %vm817, %v916, 0.0
    %v919 = vsel %vm817, %v917, 0.0
    %v920 = vadd.f32 %v918, %v919
    %921 = vadd.xlane.f32.xlu0 %v920
    %v922 = vpop.xlane.xlu0 %921
    %v923 = vmul.f32 %v922, 10.0
    %v924 = vmul.f32 %v923, 1.442695
    %v925 = vpow.pop %v924
    %vm926 = vcmask 9216
    %v927 = vsel %vm926, %v915, 0.0
    %928 = vadd.xlane.f32.xlu0 %v927
    %v929 = vpop.xlane.xlu0 %928
    %v930 = vsub.f32 %v929, %v925
    %v931 = vlog2.pop %v930
    %v932 = vmul.f32 %v931, 0.6931472
    %v933 = vsub.f32 %v923, %v932
    %v934 = vsel %vm817, %v933, 0.0
    %v935 = vrot.slane %v934, 4
    %v936 = vadd.f32 %v934, %v935
    %v937 = vrot.slane %v936, 2
    %v938 = vadd.f32 %v936, %v937
    %v939 = vrot.slane %v938, 1
    %v940 = vadd.f32 %v938, %v939
    %v941 = vmul.f32 %v940, -0.5
    %s942 = vtos %v941
    %s943 = scalar_lea.smem [#allocation4], 0
    %944 = sst [smem:[%s943]] %s942
    // Predicated region
    $region56: #{net_aug_loss.1} parent=1 // pred_check
      _
    $region57: #{net_aug_loss.1} parent=1 // pred_check_branch
      %946 = sbr.rel (0) target = $region59
    $region58: #{net_aug_loss.1} parent=1 // pred_region
      %s948 = ssub.s32 16, 16
      %949 = vsyncadd [#allocation5], %s948
      %952 = dma.smem_to_hbm [#allocation4], 16, %s6, [#allocation5]
    $region59: #{net_aug_loss.1} parent=1 // pred_fallthru
      _
    // Predicated region
    $region60: #{net_aug_loss.1} parent=1 // pred_check
      _
    $region61: #{net_aug_loss.1} parent=1 // pred_check_branch
      %954 = sbr.rel (0) target = $region63
    $region62: #{net_aug_loss.1} parent=1 // pred_region
      %955 = dma.done [#allocation5], 16
    $region63: #{net_aug_loss.1} parent=1 // pred_fallthru
      _
    %956 = sfence
    %957 = vsyncpa [#allocation5], 1
  %958 = vsyncmov [#allocation3]
  %s959 = vpop.sfrf %958
  %p960 = scmp.eq.s32.totalorder %s959, 0
  %p961 = pneg %p960
  %963 = shalt.err (%p961)

</llo_original>
